<compile_context>
chip_gen: v7x
topology: tpu7x:2x2x1
jax: 0.10.0
libtpu: 0.0.40
codegen_flags: <defaults>
</compile_context>

<pallas_src>
import jax
import jax.numpy as jnp
from jax import lax
from jax.experimental import pallas as pl
from jax.experimental.pallas import tpu as pltpu


def _round_up(x, m):
    return ((x + m - 1) // m) * m


def bert_embedding_kernel(tokens_smem,    # SMEM (B, S_pad) int32  (scalar prefetch)
                          segments_ref,   # VMEM (1, TILE_S, 1) int32
                          tok_emb_hbm,    # HBM  (V, H)            (memory_space=pl.ANY)
                          seg_emb_ref,    # VMEM (2, H)
                          pos_ref,        # VMEM (1, TILE_S, H)
                          out_ref,        # VMEM (1, TILE_S, H)
                          tok_rows_buf,   # VMEM scratch (TILE_S, H)
                          dma_sem):       # DMA semaphore
    b = pl.program_id(0)
    st = pl.program_id(1)
    tile_s = out_ref.shape[1]
    vocab = tok_emb_hbm.shape[0]
    s_base = st * tile_s

    # ---- token gather: one row DMA per token, all in flight at once ------
    @pl.loop(0, tile_s)
    def _issue(i):
        tok = tokens_smem[b, s_base + i]
        tok = jnp.minimum(jnp.maximum(tok, 0), vocab - 1)   # never DMA out of bounds
        pltpu.make_async_copy(tok_emb_hbm.at[tok], tok_rows_buf.at[i], dma_sem).start()

    @pl.loop(0, tile_s)
    def _wait(i):
        pltpu.make_async_copy(tok_emb_hbm.at[0], tok_rows_buf.at[i], dma_sem).wait()

    # ---- segment lookup: only 2 rows -> broadcast select on the VPU ------
    seg_ids = segments_ref[0]                              # (TILE_S, 1) int32
    seg_rows = jnp.where(seg_ids > 0,
                         seg_emb_ref[1:2, :],              # (1, H)
                         seg_emb_ref[0:1, :])              # -> (TILE_S, H)

    # ---- 3-way add + single lane-dense full-tile store -------------------
    out_ref[0] = (tok_rows_buf[...] + seg_rows + pos_ref[0]).astype(out_ref.dtype)


def bert_embedding(tokens, segments, tok_emb, seg_emb, pos_enc, *,
                   out_dtype=jnp.float32):
    tokens = jnp.asarray(tokens, jnp.int32)
    segments = jnp.asarray(segments, jnp.int32)
    tok_emb = jnp.asarray(tok_emb)
    seg_emb = jnp.asarray(seg_emb)
    pos_enc = jnp.asarray(pos_enc)

    B, S = tokens.shape
    V, H = tok_emb.shape
    max_len = pos_enc.shape[1]
    assert S <= max_len, "sequence longer than positional encoding"

    # Sequence tiling: whole (8-rounded) sequence as one tile up to 256 rows,
    # otherwise 256-row tiles (pad sequence up to a multiple of the tile).
    s_pad8 = _round_up(S, 8)
    tile_s = min(256, s_pad8)
    s_pad = _round_up(s_pad8, tile_s)

    if s_pad != S:
        pad = s_pad - S
        tokens = jnp.pad(tokens, ((0, 0), (0, pad)))
        segments = jnp.pad(segments, ((0, 0), (0, pad)))

    # pos_enc stays unsliced; only pad when the padded sequence outruns it.
    pos = pos_enc
    if s_pad > max_len:
        pos = jnp.pad(pos_enc, ((0, 0), (0, s_pad - max_len), (0, 0)))

    segments3 = segments.reshape(B, s_pad, 1)
    grid = (B, s_pad // tile_s)

    # Explicit VMEM budget: only the small per-tile buffers live in VMEM.
    out_isz = jnp.dtype(out_dtype).itemsize
    tab_isz = jnp.dtype(tok_emb.dtype).itemsize
    pos_isz = jnp.dtype(pos.dtype).itemsize
    seg_isz = jnp.dtype(seg_emb.dtype).itemsize
    vmem_needed = (tile_s * H * tab_isz          # gather scratch
                   + 2 * tile_s * H * pos_isz    # pos blocks (double-buffered)
                   + 2 * tile_s * H * out_isz    # out blocks (double-buffered)
                   + 2 * tile_s * 4              # segment-id blocks
                   + 2 * 2 * H * seg_isz)        # segment table
    vmem_limit = int(min(64 << 20, max(32 << 20, 2 * vmem_needed + (2 << 20))))

    # Advisory cost: this kernel is a pure HBM gather + two adds.
    flops = 2 * B * s_pad * H
    bytes_accessed = (B * s_pad * H * tab_isz        # gathered token rows
                      + B * s_pad * H * out_isz      # output write-back
                      + B * s_pad * H * pos_isz      # positional rows (per batch tile)
                      + 2 * H * seg_isz              # segment table
                      + 2 * B * s_pad * 4)           # token / segment ids
    cost = pl.CostEstimate(flops=flops, transcendentals=0,
                           bytes_accessed=bytes_accessed)

    out = pl.pallas_call(
        bert_embedding_kernel,
        out_shape=jax.ShapeDtypeStruct((B, s_pad, H), out_dtype),
        grid_spec=pltpu.PrefetchScalarGridSpec(
            num_scalar_prefetch=1,                                      # token ids -> SMEM
            grid=grid,
            in_specs=[
                pl.BlockSpec((1, tile_s, 1), lambda b, s, tok: (b, s, 0)),   # segment ids
                pl.BlockSpec(memory_space=pl.ANY),                           # token table (HBM)
                pl.BlockSpec((2, H), lambda b, s, tok: (0, 0)),              # segment table
                pl.BlockSpec((1, tile_s, H), lambda b, s, tok: (0, s, 0)),   # pos rows
            ],
            out_specs=pl.BlockSpec((1, tile_s, H), lambda b, s, tok: (b, s, 0)),
            scratch_shapes=[
                pltpu.VMEM((tile_s, H), tok_emb.dtype),
                pltpu.SemaphoreType.DMA,
            ],
        ),
        compiler_params=pltpu.CompilerParams(
            dimension_semantics=("parallel", "parallel"),
            vmem_limit_bytes=vmem_limit),
        cost_estimate=cost,
    )(tokens, segments3, tok_emb, seg_emb, pos)

    if s_pad != S:
        out = out[:, :S]
    return out


if __name__ == "__main__":
    # Small shapes consistent with the module's forward.
    B, S = 2, 8
    vocab_size, embed_dim, max_len = 50, 32, 16

    key = jax.random.PRNGKey(0)
    k_tok, k_seg_tbl, k_pos, k_ids, k_segids = jax.random.split(key, 5)

    # nn.Embedding default init ~ N(0, 1); positional_encoding = torch.randn(...)
    token_embedding = jax.random.normal(k_tok, (vocab_size, embed_dim), jnp.float32)
    segment_embedding = jax.random.normal(k_seg_tbl, (2, embed_dim), jnp.float32)
    positional_encoding = jax.random.normal(k_pos, (1, max_len, embed_dim), jnp.float32)

    tokens = jax.random.randint(k_ids, (B, S), 0, vocab_size, dtype=jnp.int32)
    segments = jax.random.randint(k_segids, (B, S), 0, 2, dtype=jnp.int32)

    out = bert_embedding(tokens, segments,
                         token_embedding, segment_embedding, positional_encoding)
    out = jax.block_until_ready(out)

    # Pure-JAX reference for correctness (gather path is exact in f32).
    ref = (jnp.take(token_embedding, tokens, axis=0)
           + jnp.take(segment_embedding, segments, axis=0)
           + positional_encoding[:, :S])
    assert out.shape == (B, S, embed_dim)
    assert jnp.allclose(out, ref, atol=1e-5, rtol=1e-5), "mismatch vs reference"

    print("KERNEL_OK")
</pallas_src>

<mosaic_0001>
module attributes {stable_mosaic.version = 11 : i64} {
  func.func @bert_embedding_kernel(%arg0: i32, %arg1: i32, %arg2: memref<2x8xi32, #tpu.memory_space<smem>>, %arg3: memref<1x8x1xi32, #tpu.memory_space<vmem>>, %arg4: memref<50x32xf32, #tpu.memory_space<any>>, %arg5: memref<2x32xf32, #tpu.memory_space<vmem>>, %arg6: memref<1x8x32xf32, #tpu.memory_space<vmem>>, %arg7: memref<1x8x32xf32, #tpu.memory_space<vmem>>, %arg8: memref<8x32xf32, #tpu.memory_space<vmem>>, %arg9: memref<!tpu.dma_semaphore, #tpu.memory_space<semaphore_mem>>) attributes {dimension_semantics = [#tpu.dimension_semantics<parallel>, #tpu.dimension_semantics<parallel>], iteration_bounds = array<i64: 2, 1>, scalar_prefetch = 1 : i64, scratch_operands = 2 : i64, tpu.core_type = #tpu.core_type<tc>, window_params = [{transform_indices = @transform_0, window_bounds = array<i64: 1, 8, 1>}, {}, {pipeline_mode = #tpu.pipeline_mode<synchronous>, transform_indices = @transform_2, window_bounds = array<i64: 2, 32>}, {transform_indices = @transform_3, window_bounds = array<i64: 1, 8, 32>}, {transform_indices = @transform_4, window_bounds = array<i64: 1, 8, 32>}]} {
    %c8_i32 = arith.constant 8 : i32
    %0 = arith.muli %arg1, %c8_i32 : i32
    %c0_i32 = arith.constant 0 : i32
    %c8_i32_0 = arith.constant 8 : i32
    %1 = arith.addi %c0_i32, %c8_i32_0 : i32
    %c1_i32 = arith.constant 1 : i32
    scf.for %arg10 = %c0_i32 to %1 step %c1_i32  : i32 {
      %c1_i32_20 = arith.constant 1 : i32
      %24 = arith.muli %arg10, %c1_i32_20 : i32
      %c0_i32_21 = arith.constant 0 : i32
      %25 = arith.addi %c0_i32_21, %24 : i32
      %26 = arith.addi %0, %25 : i32
      %27 = arith.index_cast %arg0 : i32 to index
      %28 = arith.index_cast %26 : i32 to index
      %29 = memref.load %arg2[%27, %28] : memref<2x8xi32, #tpu.memory_space<smem>>
      %c0_i32_22 = arith.constant 0 : i32
      %30 = arith.maxsi %29, %c0_i32_22 : i32
      %c49_i32 = arith.constant 49 : i32
      %31 = arith.minsi %30, %c49_i32 : i32
      %c0_i32_23 = arith.constant 0 : i32
      %32 = tpu.memref_slice %arg4[%31, %c0_i32_23] : memref<50x32xf32, #tpu.memory_space<any>> -> memref<1x32xf32, #tpu.memory_space<any>>
      %33 = tpu.memref_squeeze %32 : memref<1x32xf32, #tpu.memory_space<any>> -> memref<32xf32, #tpu.memory_space<any>>
      %c0_i32_24 = arith.constant 0 : i32
      %34 = tpu.memref_slice %arg8[%25, %c0_i32_24] : memref<8x32xf32, #tpu.memory_space<vmem>> -> memref<1x32xf32, #tpu.memory_space<vmem>>
      %35 = tpu.memref_squeeze %34 : memref<1x32xf32, #tpu.memory_space<vmem>> -> memref<32xf32, #tpu.memory_space<vmem>>
      tpu.enqueue_dma source(%33 : memref<32xf32, #tpu.memory_space<any>>) target(%35 : memref<32xf32, #tpu.memory_space<vmem>>) target_semaphore(%arg9 : memref<!tpu.dma_semaphore, #tpu.memory_space<semaphore_mem>>)
    }
    %c8_i32_1 = arith.constant 8 : i32
    %c0_i32_2 = arith.constant 0 : i32
    %c8_i32_3 = arith.constant 8 : i32
    %2 = arith.addi %c0_i32_2, %c8_i32_3 : i32
    %c1_i32_4 = arith.constant 1 : i32
    scf.for %arg10 = %c0_i32_2 to %2 step %c1_i32_4  : i32 {
      %c1_i32_20 = arith.constant 1 : i32
      %24 = arith.muli %arg10, %c1_i32_20 : i32
      %c0_i32_21 = arith.constant 0 : i32
      %25 = arith.addi %c0_i32_21, %24 : i32
      %c0_i32_22 = arith.constant 0 : i32
      %c0_i32_23 = arith.constant 0 : i32
      %26 = tpu.memref_slice %arg4[%c0_i32_22, %c0_i32_23] : memref<50x32xf32, #tpu.memory_space<any>> -> memref<1x32xf32, #tpu.memory_space<any>>
      %27 = tpu.memref_squeeze %26 : memref<1x32xf32, #tpu.memory_space<any>> -> memref<32xf32, #tpu.memory_space<any>>
      %c0_i32_24 = arith.constant 0 : i32
      %28 = tpu.memref_slice %arg8[%25, %c0_i32_24] : memref<8x32xf32, #tpu.memory_space<vmem>> -> memref<1x32xf32, #tpu.memory_space<vmem>>
      %29 = tpu.memref_squeeze %28 : memref<1x32xf32, #tpu.memory_space<vmem>> -> memref<32xf32, #tpu.memory_space<vmem>>
      tpu.wait_dma2 semaphore(%arg9 : memref<!tpu.dma_semaphore, #tpu.memory_space<semaphore_mem>>) src(%27 : memref<32xf32, #tpu.memory_space<any>>) dst(%29 : memref<32xf32, #tpu.memory_space<vmem>>)
    }
    %c8_i32_5 = arith.constant 8 : i32
    %c0 = arith.constant 0 : index
    %c0_6 = arith.constant 0 : index
    %c0_7 = arith.constant 0 : index
    %3 = vector.load %arg3[%c0, %c0_6, %c0_7] : memref<1x8x1xi32, #tpu.memory_space<vmem>>, vector<1x8x1xi32>
    %4 = vector.shape_cast %3 : vector<1x8x1xi32> to vector<8x1xi32>
    %c0_i32_8 = arith.constant 0 : i32
    %5 = vector.broadcast %c0_i32_8 : i32 to vector<8x1xi32>
    %6 = arith.cmpi sgt, %4, %5 : vector<8x1xi32>
    %c1 = arith.constant 1 : index
    %c0_9 = arith.constant 0 : index
    %7 = vector.load %arg5[%c1, %c0_9] : memref<2x32xf32, #tpu.memory_space<vmem>>, vector<1x32xf32>
    %c0_10 = arith.constant 0 : index
    %c0_11 = arith.constant 0 : index
    %8 = vector.load %arg5[%c0_10, %c0_11] : memref<2x32xf32, #tpu.memory_space<vmem>>, vector<1x32xf32>
    %9 = vector.shape_cast %6 : vector<8x1xi1> to vector<8x1xi1>
    %10 = vector.broadcast %9 : vector<8x1xi1> to vector<8x32xi1>
    %11 = vector.shape_cast %7 : vector<1x32xf32> to vector<1x32xf32>
    %12 = vector.broadcast %11 : vector<1x32xf32> to vector<8x32xf32>
    %13 = vector.shape_cast %8 : vector<1x32xf32> to vector<1x32xf32>
    %14 = vector.broadcast %13 : vector<1x32xf32> to vector<8x32xf32>
    %15 = arith.select %10, %12, %14 : vector<8x32xi1>, vector<8x32xf32>
    %c0_12 = arith.constant 0 : index
    %c0_13 = arith.constant 0 : index
    %16 = vector.load %arg8[%c0_12, %c0_13] : memref<8x32xf32, #tpu.memory_space<vmem>>, vector<8x32xf32>
    %17 = arith.addf %16, %15 : vector<8x32xf32>
    %c0_14 = arith.constant 0 : index
    %c0_15 = arith.constant 0 : index
    %c0_16 = arith.constant 0 : index
    %18 = vector.load %arg6[%c0_14, %c0_15, %c0_16] : memref<1x8x32xf32, #tpu.memory_space<vmem>>, vector<1x8x32xf32>
    %19 = vector.shape_cast %18 : vector<1x8x32xf32> to vector<8x32xf32>
    %20 = arith.addf %17, %19 : vector<8x32xf32>
    %c0_17 = arith.constant 0 : index
    %c0_18 = arith.constant 0 : index
    %c0_19 = arith.constant 0 : index
    %21 = vector.load %arg7[%c0_17, %c0_18, %c0_19] : memref<1x8x32xf32, #tpu.memory_space<vmem>>, vector<1x8x32xf32>
    %22 = vector.shape_cast %21 : vector<1x8x32xf32> to vector<8x32xf32>
    %23 = vector.shape_cast %20 : vector<8x32xf32> to vector<1x8x32xf32>
    tpu.vector_store %arg7[%c0_17, %c0_18, %c0_19], %23 {strides = array<i32>} : memref<1x8x32xf32, #tpu.memory_space<vmem>>, vector<1x8x32xf32>,
    return
  }
  func.func @transform_0(%arg0: i32, %arg1: i32, %arg2: memref<2x8xi32, #tpu.memory_space<smem>>) -> (i32, i32, i32) {
    %c0_i32 = arith.constant 0 : i32
    %c0_i32_0 = arith.constant 0 : i32
    return %arg0, %arg1, %c0_i32 : i32, i32, i32
  }
  func.func @transform_2(%arg0: i32, %arg1: i32, %arg2: memref<2x8xi32, #tpu.memory_space<smem>>) -> (i32, i32) {
    %c0_i32 = arith.constant 0 : i32
    %c0_i32_0 = arith.constant 0 : i32
    %c0_i32_1 = arith.constant 0 : i32
    return %c0_i32, %c0_i32_0 : i32, i32
  }
  func.func @transform_3(%arg0: i32, %arg1: i32, %arg2: memref<2x8xi32, #tpu.memory_space<smem>>) -> (i32, i32, i32) {
    %c0_i32 = arith.constant 0 : i32
    %c0_i32_0 = arith.constant 0 : i32
    %c0_i32_1 = arith.constant 0 : i32
    return %c0_i32, %arg1, %c0_i32_0 : i32, i32, i32
  }
  func.func @transform_4(%arg0: i32, %arg1: i32, %arg2: memref<2x8xi32, #tpu.memory_space<smem>>) -> (i32, i32, i32) {
    %c0_i32 = arith.constant 0 : i32
    %c0_i32_0 = arith.constant 0 : i32
    return %arg0, %arg1, %c0_i32 : i32, i32, i32
  }
}

</mosaic_0001>

<llo_original>
// kernel: tpu_custom_call.1
$region0: #{tpu_custom_call.1}
  #allocation0 [shape = 'u32[]', space=smem, size = 0x4, offset = 0x4, fixed_abs, tag = 'smem constant byte address 0x4 - core index']
  #allocation1 [shape = 'u32[144,128]{1,0:T(1,128)}', space=vmem, size = 0x12000, scoped, tag = 'internal scratch']
  #allocation2 [shape = 'f32[8,32]{1,0:T(8,128)}', space=vmem, size = 0x1000, scoped, tag = 'scratch operand']
  #allocation3 [shape = 's32[1]{0}', space=sflag, size = 0x4, scoped, tag = 'scratch operand']
  #allocation4 [shape = 's32[1]{0}', space=sflag, size = 0x4, scoped, tag = 'scoped memory for tpu_custom_call.1']
  #allocation5 [shape = 'u8[1024]{0}', space=smem, size = 0x400, scoped, tag = 'prefetched SMEM operand 0']
  #allocation8 [shape = 's32[]', space=sflag, size = 0x4, offset = 0, fixed_abs, tag = 'sflag constant byte address 0x0 - dummy sync flag']
  %s0 = inlined_call_operand.vmem [shape: s32[2,8], index: 0, kind: input, shape index: {}]
  %s1 = inlined_call_operand.vmem [shape: s32[2,8,1], index: 1, kind: input, shape index: {}]
  %s2 = inlined_call_operand.vmem [shape: f32[50,32], index: 2, kind: input, shape index: {}]
  %s3 = inlined_call_operand.vmem [shape: f32[2,32], index: 3, kind: input, shape index: {}]
  %s4 = inlined_call_operand.vmem [shape: f32[1,16,32], index: 4, kind: input, shape index: {}]
  %s5 = inlined_call_operand.hbm [shape: f32[2,8,32], index: 5, kind: output, shape index: {}]
  %s6 = sld [smem:[#allocation0]]
  $region89: #{tpu_custom_call.1} parent=0
    _
  %s8 = ssub.s32 1, %s6
  %s9 = scalar_select 0, %s8, %s6
  %s10 = sshll.u32 %s0, 4
  %s11 = int_to_ptr.vmem [resolvable:$true] %s10
  %13 = dma.vmem_to_smem %s11, 32, [#allocation5], [#allocation4]
  %14 = dma.done [#allocation4], 32
  %15 = sfence
  $region1: #{tpu_custom_call.1} parent=0
    #allocation6 [shape = 'u8[8192]{0}', space=vmem, size = 0x2000, scoped, tag = 'output window, operand 0']
    #allocation7 [shape = 's32[2]{0}', space=sflag, size = 0x8, scoped, tag = 'scoped memory for tpu_custom_call.1']
    %16 = vsyncpa [#allocation7], 0
    %s17 = scalar_lea.sflag [#allocation7], 1
    %18 = vsyncpa %s17, 0
    loop: start=0, step=1, limit=4
    $region2: #{tpu_custom_call.1} parent=1 // loop_pre_header
      _
    $region3: #{tpu_custom_call.1} parent=1 // loop_header
      %s20 = sphi 0, %s24
      %p21 = scmp.ge.s32.totalorder %s20, 4
      %s27 = sphi 0, %s39
      %s28 = sphi 0, %s35
      %s29 = sphi 0, %s27
      %s30 = sphi 0, %s28
      %s31 = sphi 0, %s29
      %s32 = sphi 0, %s30
      %s44 = sphi 0, %s46
      %s47 = sphi 0, %s44
      %s48 = sphi 0, %s47
      %s64 = sphi 0, %s48
      %s68 = sphi 0, %s68
      %s70 = sphi 0, %s68
      %s71 = sphi 0, %s70
      %s85 = sphi 0, %s71
      %s91 = sphi 0, %s93
      %s94 = sphi 0, %s91
      %s95 = sphi 0, %s94
      %s111 = sphi 0, %s95
      %s119 = sphi 0, %s121
      %s122 = sphi 0, %s119
      %s123 = sphi 0, %s122
      %s139 = sphi 0, %s123
    $region4: #{tpu_custom_call.1} parent=1 // loop_header_branch
      %23 = sbr.rel (%p21) target = $region8
    $region5: #{tpu_custom_call.1} parent=1 // loop_body
      %s25 = ssub.s32 %s20, 1
      %s26 = ssub.s32 %s20, 2
      %s33 = sadd.s32 1, %s28
      %p34 = scmp.ge.s32.totalorder %s33, 1
      %s35 = scalar_select %p34, 0, %s33
      %s36 = sadd.s32 1, %s27
      %s37 = scalar_select %p34, %s36, %s27
      %p38 = scmp.ge.s32.totalorder %s37, 2
      %s39 = scalar_select %p38, 0, %s37
      %s40 = ssub.s32 %s27, %s39
      %s41 = ssub.s32 %s28, %s35
      %s42 = sor.u32 %s40, %s41
      %p43 = scmp.eq.s32.totalorder %s42, 0
      %s45 = sadd.s32 %s44, 1
      %s46 = scalar_select %p43, %s44, %s45
      %p49 = pneg %p43
      %p50 = scmp.eq.s32.totalorder %s20, 1
      %p51 = por %p49, %p50
      %p52 = scmp.ne.s32.totalorder %s44, %s47
      %p53 = scmp.eq.s32.totalorder %s20, 0
      %p54 = por %p52, %p53
      %p55 = scmp.ne.s32.totalorder %s44, %s47
      %p56 = scmp.eq.s32.totalorder %s25, 1
      %p57 = por %p55, %p56
      %p58 = scmp.ne.s32.totalorder %s47, %s48
      %p59 = scmp.eq.s32.totalorder %s25, 0
      %p60 = por %p58, %p59
      %p61 = scmp.ne.s32.totalorder %s47, %s48
      %p62 = scmp.eq.s32.totalorder %s26, 1
      %p63 = por %p61, %p62
      %p65 = scmp.ne.s32.totalorder %s48, %s64
      %p66 = scmp.eq.s32.totalorder %s26, 0
      %p67 = por %p65, %p66
      %s69 = sadd.s32 %s68, 1
      %p72 = scmp.eq.s32.totalorder %s20, 1
      %p73 = scmp.ne.s32.totalorder %s68, %s70
      %p74 = scmp.eq.s32.totalorder %s20, 0
      %p75 = por %p73, %p74
      %p76 = scmp.ne.s32.totalorder %s68, %s70
      %p77 = scmp.eq.s32.totalorder %s25, 1
      %p78 = por %p76, %p77
      %p79 = scmp.ne.s32.totalorder %s70, %s71
      %p80 = scmp.eq.s32.totalorder %s25, 0
      %p81 = por %p79, %p80
      %p82 = scmp.ne.s32.totalorder %s70, %s71
      %p83 = scmp.eq.s32.totalorder %s26, 1
      %p84 = por %p82, %p83
      %p86 = scmp.ne.s32.totalorder %s71, %s85
      %p87 = scmp.eq.s32.totalorder %s26, 0
      %p88 = por %p86, %p87
      %s89 = ssub.s32 %s28, %s35
      %p90 = scmp.eq.s32.totalorder %s89, 0
      %s92 = sadd.s32 %s91, 1
      %s93 = scalar_select %p90, %s91, %s92
      %p96 = pneg %p90
      %p97 = scmp.eq.s32.totalorder %s20, 1
      %p98 = por %p96, %p97
      %p99 = scmp.ne.s32.totalorder %s91, %s94
      %p100 = scmp.eq.s32.totalorder %s20, 0
      %p101 = por %p99, %p100
      %p102 = scmp.ne.s32.totalorder %s91, %s94
      %p103 = scmp.eq.s32.totalorder %s25, 1
      %p104 = por %p102, %p103
      %p105 = scmp.ne.s32.totalorder %s94, %s95
      %p106 = scmp.eq.s32.totalorder %s25, 0
      %p107 = por %p105, %p106
      %p108 = scmp.ne.s32.totalorder %s94, %s95
      %p109 = scmp.eq.s32.totalorder %s26, 1
      %p110 = por %p108, %p109
      %p112 = scmp.ne.s32.totalorder %s95, %s111
      %p113 = scmp.eq.s32.totalorder %s26, 0
      %p114 = por %p112, %p113
      %s115 = ssub.s32 %s27, %s39
      %s116 = ssub.s32 %s28, %s35
      %s117 = sor.u32 %s115, %s116
      %p118 = scmp.eq.s32.totalorder %s117, 0
      %s120 = sadd.s32 %s119, 1
      %s121 = scalar_select %p118, %s119, %s120
      %p124 = pneg %p118
      %p125 = scmp.eq.s32.totalorder %s20, 1
      %p126 = por %p124, %p125
      %p127 = scmp.ne.s32.totalorder %s119, %s122
      %p128 = scmp.eq.s32.totalorder %s20, 0
      %p129 = por %p127, %p128
      %p130 = scmp.ne.s32.totalorder %s119, %s122
      %p131 = scmp.eq.s32.totalorder %s25, 1
      %p132 = por %p130, %p131
      %p133 = scmp.ne.s32.totalorder %s122, %s123
      %p134 = scmp.eq.s32.totalorder %s25, 0
      %p135 = por %p133, %p134
      %p136 = scmp.ne.s32.totalorder %s122, %s123
      %p137 = scmp.eq.s32.totalorder %s26, 1
      %p138 = por %p136, %p137
      %p140 = scmp.ne.s32.totalorder %s123, %s139
      %p141 = scmp.eq.s32.totalorder %s26, 0
      %p142 = por %p140, %p141
      %p143 = scmp.le.s32.totalorder 1, %s20
      %p144 = scmp.lt.s32.totalorder %s20, 3
      %p145 = pnand %p143, %p144
      %p146 = pneg %p145
      // Predicated region
      $region9: #{tpu_custom_call.1} parent=5 // pred_check
        _
      $region10: #{tpu_custom_call.1} parent=5 // pred_check_branch
        %148 = sbr.rel (%p145) target = $region12
      $region11: #{tpu_custom_call.1} parent=5 // pred_region
        %s149 = ssub.s32 %s20, 1
        // Predicated region
        $region13: #{tpu_custom_call.1} parent=11 // pred_check
          %p150 = pneg %p81
        $region14: #{tpu_custom_call.1} parent=11 // pred_check_branch
          %152 = sbr.rel (%p150) target = $region16
        $region15: #{tpu_custom_call.1} parent=11 // pred_region
          _
        $region16: #{tpu_custom_call.1} parent=11 // pred_fallthru
          _
        // Predicated region
        $region17: #{tpu_custom_call.1} parent=11 // pred_check
          %p153 = pneg %p107
        $region18: #{tpu_custom_call.1} parent=11 // pred_check_branch
          %155 = sbr.rel (%p153) target = $region20
        $region19: #{tpu_custom_call.1} parent=11 // pred_region
          %p156 = scmp.lt.s32.totalorder %s30, 1
          %s157 = scalar_select %p156, %s30, 1
          %s158 = smul.addr %s157, 8
          %s159 = scalar_lea.vmem %s4, %s158
        $region20: #{tpu_custom_call.1} parent=11 // pred_fallthru
          _
      $region12: #{tpu_custom_call.1} parent=5 // pred_fallthru
        _
      %p160 = scmp.lt.s32.totalorder %s20, 2
      // Predicated region
      $region21: #{tpu_custom_call.1} parent=5 // pred_check
        %p161 = pneg %p160
      $region22: #{tpu_custom_call.1} parent=5 // pred_check_branch
        %163 = sbr.rel (%p161) target = $region24
      $region23: #{tpu_custom_call.1} parent=5 // pred_region
        // Predicated region
        $region25: #{tpu_custom_call.1} parent=23 // pred_check
          %p164 = pneg %p54
        $region26: #{tpu_custom_call.1} parent=23 // pred_check_branch
          %166 = sbr.rel (%p164) target = $region28
        $region27: #{tpu_custom_call.1} parent=23 // pred_region
          %p167 = scmp.lt.s32.totalorder %s27, 1
          %s168 = scalar_select %p167, %s27, 1
          %p169 = scmp.lt.s32.totalorder %s28, 0
          %s170 = scalar_select %p169, %s28, 0
          %s171 = sadd.s32 %s170, %s168
          %s172 = smul.addr %s171, 8
          %s173 = scalar_lea.vmem %s1, %s172
        $region28: #{tpu_custom_call.1} parent=23 // pred_fallthru
          _
      $region24: #{tpu_custom_call.1} parent=5 // pred_fallthru
        _
      %p174 = scmp.le.s32.totalorder 1, %s20
      %p175 = scmp.lt.s32.totalorder %s20, 3
      %p176 = pnand %p174, %p175
      %p177 = pneg %p176
      // Predicated region
      $region29: #{tpu_custom_call.1} parent=5 // pred_check
        _
      $region30: #{tpu_custom_call.1} parent=5 // pred_check_branch
        %179 = sbr.rel (%p176) target = $region32
      $region31: #{tpu_custom_call.1} parent=5 // pred_region
        %s180 = ssub.s32 %s20, 1
        %p181 = scmp.lt.s32.totalorder %s29, 1
        %s182 = scalar_select %p181, %s29, 1
        %p183 = scmp.lt.s32.totalorder %s30, 0
        %s184 = scalar_select %p183, %s30, 0
        %s185 = sadd.s32 %s184, %s182
        %s186 = smul.addr %s185, 8
        %s187 = scalar_lea.vmem %s1, %s186
        %p188 = pneg %p60
        %p189 = pneg %p57
        %p190 = pneg %p81
        %p191 = pneg %p78
        %p192 = scmp.lt.s32.totalorder %s30, 1
        %s193 = scalar_select %p192, %s30, 1
        %s194 = smul.addr %s193, 8
        %s195 = scalar_lea.vmem %s4, %s194
        %p196 = pneg %p107
        %p197 = pneg %p104
        %p198 = pneg %p135
        %p199 = pneg %p132
        %s200 = sand.u32 %s122, 1
        %s201 = scalar_lea.sflag [#allocation7], %s200
        %s202 = sand.u32 %s122, 1
        %s203 = smul.addr %s202, 8
        %s204 = scalar_lea.vmem [#allocation6], %s203
        %p205 = scmp.lt.s32.totalorder %s29, 1
        %s206 = scalar_select %p205, %s29, 1
        %p207 = scmp.lt.s32.totalorder %s30, 0
        %s208 = scalar_select %p207, %s30, 0
        %s209 = sadd.s32 %s208, %s206
        %s210 = smul.addr %s209, 8
        %s211 = scalar_lea.vmem %s1, %s210
        %p212 = scmp.lt.s32.totalorder %s30, 1
        %s213 = scalar_select %p212, %s30, 1
        %s214 = smul.addr %s213, 8
        %s215 = scalar_lea.vmem %s4, %s214
        %s216 = smul.u32 %s30, 8
        loop: start=0, step=1, limit=8
        $region33: #{tpu_custom_call.1} parent=31 // loop_pre_header
          _
        $region34: #{tpu_custom_call.1} parent=31 // loop_header
          %s218 = sphi 0, %s222
          %p219 = scmp.ge.s32.totalorder %s218, 8
        $region35: #{tpu_custom_call.1} parent=31 // loop_header_branch
          %221 = sbr.rel (%p219) target = $region39
        $region36: #{tpu_custom_call.1} parent=31 // loop_body
          %s223 = sadd.s32 %s216, %s218
          %s224 = sshra.s32 %s223, 7
          %s225 = sand.u32 %s223, 127
          %s226 = sadd.s32 %s224, %s29
          %s227 = smul.u32 %s226, 128
          %s228 = sshra.s32 %s223, 7
          %s229 = sand.u32 %s223, 127
          %s230 = sadd.s32 %s227, %s229
          %s231 = sld [smem:[#allocation5 + %s230]]
          %p232 = scmp.gt.s32.totalorder %s231, 0
          %s233 = scalar_select %p232, %s231, 0
          %p234 = scmp.lt.s32.totalorder %s233, 49
          %s235 = scalar_select %p234, %s233, 49
          %s236 = scalar_lea.vmem %s2, %s235
          %s237 = scalar_lea.vmem [#allocation2], %s218
          %p239 = scmp.lt.u32.totalorder 1, 8
          %p240 = pneg %p239
          // Predicated region
          $region40: #{tpu_custom_call.1} parent=36 // pred_check
            _
          $region41: #{tpu_custom_call.1} parent=36 // pred_check_branch
            %242 = sbr.rel (%p239) target = $region43
          $region42: #{tpu_custom_call.1} parent=36 // pred_region
            %s257 = sand.u32 1, 7
            %p258 = scmp.eq.s32.totalorder %s257, 0
            %p259 = pneg %p258
            // Predicated region
            $region55: #{tpu_custom_call.1} parent=42 // pred_check
              _
            $region56: #{tpu_custom_call.1} parent=42 // pred_check_branch
              %261 = sbr.rel (%p258) target = $region58
            $region57: #{tpu_custom_call.1} parent=42 // pred_region
              %s262 = sand.u32 1, 7
              %s263 = ssub.s32 1, %s262
              %s264 = scalar_lea.vmem %s236, %s263
              %s265 = ssub.s32 1, %s262
              %s266 = scalar_lea.vmem %s237, %s265 [#allocation2]
              %s267 = sshllo.u32 0, %s262
              loop: start=0, step=1, limit=1
              $region59: #{tpu_custom_call.1} parent=57 // loop_pre_header
                _
              $region60: #{tpu_custom_call.1} parent=57 // loop_header
                %s269 = sphi 0, %s273
                %p270 = scmp.ge.s32.totalorder %s269, 1
                %s274 = sphi %s264, %s264
                %s275 = sphi %s266, %s266
              $region61: #{tpu_custom_call.1} parent=57 // loop_header_branch
                %272 = sbr.rel (%p270) target = $region65
              $region62: #{tpu_custom_call.1} parent=57 // loop_body
                %v276 = vld [vmem:[%s274] sm:%s267]
                %277 = vst [vmem:[%s275] sm:%s267] %v276
              $region63: #{tpu_custom_call.1} parent=57 // loop_footer
                %s273 = sadd.s32 1, %s269
              $region64: #{tpu_custom_call.1} parent=57 // loop_footer_branch
                %268 = sbr.rel target = $region60
              $region65: #{tpu_custom_call.1} parent=57 // loop_exit
                _
            $region58: #{tpu_custom_call.1} parent=42 // pred_fallthru
              _
          $region43: #{tpu_custom_call.1} parent=36 // pred_fallthru
            _
          // Predicated region
          $region44: #{tpu_custom_call.1} parent=36 // pred_check
            %p243 = pneg %p239
          $region45: #{tpu_custom_call.1} parent=36 // pred_check_branch
            %245 = sbr.rel (%p243) target = $region47
          $region46: #{tpu_custom_call.1} parent=36 // pred_region
            %s246 = sshllo.u32 0, 1
            loop: start=0, step=1, limit=1
            $region48: #{tpu_custom_call.1} parent=46 // loop_pre_header
              _
            $region49: #{tpu_custom_call.1} parent=46 // loop_header
              %s248 = sphi 0, %s252
              %p249 = scmp.ge.s32.totalorder %s248, 1
              %s253 = sphi %s236, %s236
              %s254 = sphi %s237, %s237
            $region50: #{tpu_custom_call.1} parent=46 // loop_header_branch
              %251 = sbr.rel (%p249) target = $region54
            $region51: #{tpu_custom_call.1} parent=46 // loop_body
              %v255 = vld [vmem:[%s253] sm:%s246]
              %256 = vst [vmem:[%s254] sm:%s246] %v255
            $region52: #{tpu_custom_call.1} parent=46 // loop_footer
              %s252 = sadd.s32 1, %s248
            $region53: #{tpu_custom_call.1} parent=46 // loop_footer_branch
              %247 = sbr.rel target = $region49
            $region54: #{tpu_custom_call.1} parent=46 // loop_exit
              _
          $region47: #{tpu_custom_call.1} parent=36 // pred_fallthru
            _
          // Predicated region
          $region66: #{tpu_custom_call.1} parent=36 // pred_check
            _
          $region67: #{tpu_custom_call.1} parent=36 // pred_check_branch
            %280 = sbr.rel (0) target = $region69
          $region68: #{tpu_custom_call.1} parent=36 // pred_region
            %281 = vsyncadd [#allocation3], 16
          $region69: #{tpu_custom_call.1} parent=36 // pred_fallthru
            _
        $region37: #{tpu_custom_call.1} parent=31 // loop_footer
          %s222 = sadd.s32 1, %s218
        $region38: #{tpu_custom_call.1} parent=31 // loop_footer_branch
          %217 = sbr.rel target = $region34
        $region39: #{tpu_custom_call.1} parent=31 // loop_exit
          _
        loop: start=0, step=1, limit=8
        $region70: #{tpu_custom_call.1} parent=31 // loop_pre_header
          _
        $region71: #{tpu_custom_call.1} parent=31 // loop_header
          %s283 = sphi 0, %s287
          %p284 = scmp.ge.s32.totalorder %s283, 8
        $region72: #{tpu_custom_call.1} parent=31 // loop_header_branch
          %286 = sbr.rel (%p284) target = $region76
        $region73: #{tpu_custom_call.1} parent=31 // loop_body
          %289 = dma.done [#allocation3], 16
        $region74: #{tpu_custom_call.1} parent=31 // loop_footer
          %s287 = sadd.s32 1, %s283
        $region75: #{tpu_custom_call.1} parent=31 // loop_footer_branch
          %282 = sbr.rel target = $region71
        $region76: #{tpu_custom_call.1} parent=31 // loop_exit
          _
        %v290 = vld [vmem:[%s211] sm:$0xff]
        %vm291 = vcmp.gt.s32.totalorder %v290, 0
        %v292 = vld [vmem:[%s3 + $0x1] sm:$0x1]
        %v293 = vld [vmem:[%s3] sm:$0x1]
        %v294 = vsel %vm291, 1, 0
        %295 = vset.pattern.permute.xlu0 0
        %296 = vperm.xlu0 %295, %v294
        %v297 = vpop.permute.xlu0 %296
        %vm298 = vcmp.eq.s32.totalorder %v297, 1
        %v299 = vlaneseq
        %v300 = vshrl.u32 %v299, 7
        %v301 = vsub.s32 0, %v300
        %v302 = vrot.slane %v292, %v301
        %v303 = vlaneseq
        %v304 = vshrl.u32 %v303, 7
        %v305 = vsub.s32 0, %v304
        %v306 = vrot.slane %v293, %v305
        %v307 = vsel %vm298, %v302, %v306
        %v308 = vld [vmem:[#allocation2] sm:$0xff]
        %v309 = vadd.f32 %v308, %v307
        %v310 = vld [vmem:[%s215] sm:$0xff]
        %v311 = vadd.f32 %v309, %v310
        %vm312 = vcmask 261120
        %313 = vst.msk [vmem:[%s204] sm:$0xff] %vm312, %v311
        %s314 = sand.u32 %s122, 1
        %s315 = scalar_lea.sflag [#allocation7], %s314
        %s316 = sand.u32 %s122, 1
        %s317 = smul.addr %s316, 8
        %s318 = scalar_lea.vmem [#allocation6], %s317
        // Predicated region
        $region77: #{tpu_custom_call.1} parent=31 // pred_check
          %p319 = pneg %p132
        $region78: #{tpu_custom_call.1} parent=31 // pred_check_branch
          %321 = sbr.rel (%p319) target = $region80
        $region79: #{tpu_custom_call.1} parent=31 // pred_region
          %s323 = ssub.s32 128, 128
          %324 = vsyncadd %s315, %s323
          %s325 = sadd.s32 %s30, %s29
          %s326 = smul.addr %s325, 128
          %s327 = scalar_lea.hbm %s5, %s326
          %s329 = sshll.u32 %s318, 4
          %s330 = int_to_ptr.vmem [resolvable:$true] %s329
          %332 = dma.vmem_to_hbm [thread:$0]  %s330, 128, %s327, %s315
        $region80: #{tpu_custom_call.1} parent=31 // pred_fallthru
          _
      $region32: #{tpu_custom_call.1} parent=5 // pred_fallthru
        _
      %p333 = scmp.le.s32.totalorder 2, %s20
      // Predicated region
      $region81: #{tpu_custom_call.1} parent=5 // pred_check
        %p334 = pneg %p333
      $region82: #{tpu_custom_call.1} parent=5 // pred_check_branch
        %336 = sbr.rel (%p334) target = $region84
      $region83: #{tpu_custom_call.1} parent=5 // pred_region
        %s337 = ssub.s32 %s20, 2
        // Predicated region
        $region85: #{tpu_custom_call.1} parent=83 // pred_check
          %p338 = pneg %p138
        $region86: #{tpu_custom_call.1} parent=83 // pred_check_branch
          %340 = sbr.rel (%p338) target = $region88
        $region87: #{tpu_custom_call.1} parent=83 // pred_region
          %s341 = sand.u32 %s123, 1
          %s342 = scalar_lea.sflag [#allocation7], %s341
          %s343 = sand.u32 %s123, 1
          %s344 = smul.addr %s343, 8
          %s345 = scalar_lea.vmem [#allocation6], %s344
          %346 = dma.done %s342, 128
        $region88: #{tpu_custom_call.1} parent=83 // pred_fallthru
          _
      $region84: #{tpu_custom_call.1} parent=5 // pred_fallthru
        _
    $region6: #{tpu_custom_call.1} parent=1 // loop_footer
      %s24 = sadd.s32 1, %s20
    $region7: #{tpu_custom_call.1} parent=1 // loop_footer_branch
      %19 = sbr.rel target = $region3
    $region8: #{tpu_custom_call.1} parent=1 // loop_exit
      _
    %347 = vsyncpa [#allocation7], 1
    %s348 = scalar_lea.sflag [#allocation7], 1
    %349 = vsyncpa %s348, 1
  %350 = vsyncmov [#allocation3]
  %s351 = vpop.sfrf %350
  %p352 = scmp.eq.s32.totalorder %s351, 0
  %p353 = pneg %p352
  %355 = shalt.err (%p353)

</llo_original>
